<compile_context>
chip_gen: v6e
topology: v6e:2x2x1
jax: 0.10.0
libtpu: 0.0.40
codegen_flags: <defaults>
</compile_context>

<pallas_src>
import jax
import jax.numpy as jnp
from jax.experimental import pallas as pl
from jax.experimental.pallas import tpu as pltpu


def _debugnet4_kernel(x_ref, w1_ref, w2_ref, out_ref):
    # x_ref  : VMEM (TILE_N, H, W)         f32
    # w1_ref : SMEM (1,)                   f32  -- conv1 1x1 weight (scalar)
    # w2_ref : SMEM (8,)                   f32  -- conv2 weight (cout, kh, kw) flat
    # out_ref: VMEM (TILE_N, 2, H-1, W-1)  f32
    x = x_ref[...]

    # conv1 (1x1, 1->1 channel, no bias) + ReLU
    y1 = jnp.maximum(x * w1_ref[0], 0.0)

    n, h, w = y1.shape                  # static block shapes
    ho, wo = h - 1, w - 1

    # Hoisted: the four shifted views of y1 are shared by both output channels.
    s00 = y1[:, 0:ho, 0:wo]
    s01 = y1[:, 0:ho, 1:1 + wo]
    s10 = y1[:, 1:1 + ho, 0:wo]
    s11 = y1[:, 1:1 + ho, 1:1 + wo]

    # conv2 (2x2, 1->2 channels, stride 1, valid, no bias) + ReLU,
    # as an unrolled sum of 4 scalar-weighted shifted slices per channel.
    for c in range(2):
        acc = s00 * w2_ref[4 * c + 0]
        acc = acc + s01 * w2_ref[4 * c + 1]
        acc = acc + s10 * w2_ref[4 * c + 2]
        acc = acc + s11 * w2_ref[4 * c + 3]
        out_ref[:, c, :, :] = jnp.maximum(acc, 0.0)


def debugnet4_forward(x, w1, w2_flat, *, tile_n=None):
    """x: (N, 1, H, W) f32 -> (N*2*(H-1)*(W-1)//8, 8) f32 (PyTorch semantics)."""
    n, c, h, w = x.shape
    assert c == 1, "DebugNet4 expects a single input channel"
    ho, wo = h - 1, w - 1
    x3 = x.reshape(n, h, w).astype(jnp.float32)

    if tile_n is None:
        # ~2 MiB per input tile; with double-buffered in/out tiles the pipeline
        # stays well under the scoped-VMEM defaults (16 MiB v5e, 32 MiB v6e/v7x).
        tile_n = max(1, min(n, (2 * 1024 * 1024) // (h * w * 4)))
    grid_n = pl.cdiv(n, tile_n)
    n_pad = grid_n * tile_n
    if n_pad != n:
        # Zero-pad the batch; zeros flow through both convs/ReLUs harmlessly
        # and are sliced off before the final view.
        x3 = jnp.pad(x3, ((0, n_pad - n), (0, 0), (0, 0)))

    out = pl.pallas_call(
        _debugnet4_kernel,
        grid=(grid_n,),
        out_shape=jax.ShapeDtypeStruct((n_pad, 2, ho, wo), jnp.float32),
        in_specs=[
            pl.BlockSpec((tile_n, h, w), lambda i: (i, 0, 0)),            # x tile
            pl.BlockSpec(memory_space=pltpu.MemorySpace.SMEM),            # conv1 w
            pl.BlockSpec(memory_space=pltpu.MemorySpace.SMEM),            # conv2 w
        ],
        out_specs=pl.BlockSpec((tile_n, 2, ho, wo), lambda i: (i, 0, 0, 0)),
        compiler_params=pltpu.CompilerParams(
            dimension_semantics=("parallel",),       # v7x: split grid over 2 TCs
            vmem_limit_bytes=32 * 1024 * 1024,
        ),
    )(x3, w1, w2_flat)

    out = out[:n]
    # TODO(synk): output keeps Wo (=W-1) as its lane dim; for large real images
    # a lane-dense (..., k*128) output slab + wrapper transpose would further
    # cut masked partial stores.
    return out.reshape(-1, 8)


def _reference(x, w1, w2_flat):
    # Pure-JAX reference mirroring the PyTorch forward.
    n, _, h, w = x.shape
    ho, wo = h - 1, w - 1
    y1 = jnp.maximum(x[:, 0] * w1[0], 0.0)                      # (N, H, W)
    w2 = w2_flat.reshape(2, 2, 2)
    outs = []
    for c in range(2):
        acc = jnp.zeros((n, ho, wo), jnp.float32)
        for di in range(2):
            for dj in range(2):
                acc = acc + y1[:, di:di + ho, dj:dj + wo] * w2[c, di, dj]
        outs.append(jnp.maximum(acc, 0.0))
    return jnp.stack(outs, axis=1).reshape(-1, 8)


if __name__ == "__main__":
    # Deterministic parameters as in the module's __init__.
    w1 = jnp.ones((1,), dtype=jnp.float32)                      # conv1.weight = 1.0
    w2_flat = jnp.arange(8, dtype=jnp.float32)                  # conv2.weight = arange(8).view(2,1,2,2)

    # Small input consistent with forward(): N=3, C=1, H=W=9
    # -> conv2 output (3, 2, 8, 8) -> view(-1, 8) = (48, 8).
    key = jax.random.PRNGKey(0)
    x = jax.random.normal(key, (3, 1, 9, 9), dtype=jnp.float32)

    # tile_n=2 exercises a multi-step grid and the batch-padding path.
    out = debugnet4_forward(x, w1, w2_flat, tile_n=2)
    out = jax.block_until_ready(out)

    ref = _reference(x, w1, w2_flat)
    assert out.shape == (3 * 2 * 8 * 8 // 8, 8)
    assert jnp.allclose(out, ref, atol=1e-5, rtol=1e-5)

    print("KERNEL_OK")
</pallas_src>

<mosaic_0001>
module attributes {stable_mosaic.version = 11 : i64} {
  func.func @_debugnet4_kernel(%arg0: i32, %arg1: memref<2x9x9xf32, #tpu.memory_space<vmem>>, %arg2: memref<1xf32, #tpu.memory_space<smem>>, %arg3: memref<8xf32, #tpu.memory_space<smem>>, %arg4: memref<2x2x8x8xf32, #tpu.memory_space<vmem>>) attributes {dimension_semantics = [#tpu.dimension_semantics<parallel>], iteration_bounds = array<i64: 2>, scalar_prefetch = 0 : i64, scratch_operands = 0 : i64, tpu.core_type = #tpu.core_type<tc>, window_params = [{transform_indices = @transform_0, window_bounds = array<i64: 2, 9, 9>}, {transform_indices = @transform_1, window_bounds = array<i64: 1>}, {transform_indices = @transform_2, window_bounds = array<i64: 8>}, {transform_indices = @transform_3, window_bounds = array<i64: 2, 2, 8, 8>}]} {
    %c0 = arith.constant 0 : index
    %c0_0 = arith.constant 0 : index
    %c0_1 = arith.constant 0 : index
    %0 = vector.load %arg1[%c0, %c0_0, %c0_1] : memref<2x9x9xf32, #tpu.memory_space<vmem>>, vector<2x9x9xf32>
    %c0_2 = arith.constant 0 : index
    %1 = memref.load %arg2[%c0_2] : memref<1xf32, #tpu.memory_space<smem>>
    %2 = vector.broadcast %1 : f32 to vector<2x9x9xf32>
    %3 = arith.mulf %0, %2 : vector<2x9x9xf32>
    %cst = arith.constant 0.000000e+00 : f32
    %4 = vector.broadcast %cst : f32 to vector<2x9x9xf32>
    %5 = arith.maximumf %3, %4 : vector<2x9x9xf32>
    %6 = vector.extract_strided_slice %5 {offsets = [0, 0, 0], sizes = [2, 8, 8], strides = [1, 1, 1]} : vector<2x9x9xf32> to vector<2x8x8xf32>
    %7 = vector.extract_strided_slice %5 {offsets = [0, 0, 1], sizes = [2, 8, 8], strides = [1, 1, 1]} : vector<2x9x9xf32> to vector<2x8x8xf32>
    %8 = vector.extract_strided_slice %5 {offsets = [0, 1, 0], sizes = [2, 8, 8], strides = [1, 1, 1]} : vector<2x9x9xf32> to vector<2x8x8xf32>
    %9 = vector.extract_strided_slice %5 {offsets = [0, 1, 1], sizes = [2, 8, 8], strides = [1, 1, 1]} : vector<2x9x9xf32> to vector<2x8x8xf32>
    %c0_3 = arith.constant 0 : index
    %10 = memref.load %arg3[%c0_3] : memref<8xf32, #tpu.memory_space<smem>>
    %11 = vector.broadcast %10 : f32 to vector<2x8x8xf32>
    %12 = arith.mulf %6, %11 : vector<2x8x8xf32>
    %c1 = arith.constant 1 : index
    %13 = memref.load %arg3[%c1] : memref<8xf32, #tpu.memory_space<smem>>
    %14 = vector.broadcast %13 : f32 to vector<2x8x8xf32>
    %15 = arith.mulf %7, %14 : vector<2x8x8xf32>
    %16 = arith.addf %12, %15 : vector<2x8x8xf32>
    %c2 = arith.constant 2 : index
    %17 = memref.load %arg3[%c2] : memref<8xf32, #tpu.memory_space<smem>>
    %18 = vector.broadcast %17 : f32 to vector<2x8x8xf32>
    %19 = arith.mulf %8, %18 : vector<2x8x8xf32>
    %20 = arith.addf %16, %19 : vector<2x8x8xf32>
    %c3 = arith.constant 3 : index
    %21 = memref.load %arg3[%c3] : memref<8xf32, #tpu.memory_space<smem>>
    %22 = vector.broadcast %21 : f32 to vector<2x8x8xf32>
    %23 = arith.mulf %9, %22 : vector<2x8x8xf32>
    %24 = arith.addf %20, %23 : vector<2x8x8xf32>
    %cst_4 = arith.constant 0.000000e+00 : f32
    %25 = vector.broadcast %cst_4 : f32 to vector<2x8x8xf32>
    %26 = arith.maximumf %24, %25 : vector<2x8x8xf32>
    %c0_5 = arith.constant 0 : index
    %c0_6 = arith.constant 0 : index
    %c0_7 = arith.constant 0 : index
    %c0_8 = arith.constant 0 : index
    %27 = vector.load %arg4[%c0_5, %c0_6, %c0_7, %c0_8] : memref<2x2x8x8xf32, #tpu.memory_space<vmem>>, vector<2x1x8x8xf32>
    %28 = vector.shape_cast %27 : vector<2x1x8x8xf32> to vector<2x8x8xf32>
    %29 = vector.shape_cast %26 : vector<2x8x8xf32> to vector<2x1x8x8xf32>
    tpu.vector_store %arg4[%c0_5, %c0_6, %c0_7, %c0_8], %29 {strides = array<i32>} : memref<2x2x8x8xf32, #tpu.memory_space<vmem>>, vector<2x1x8x8xf32>,
    %c4 = arith.constant 4 : index
    %30 = memref.load %arg3[%c4] : memref<8xf32, #tpu.memory_space<smem>>
    %31 = vector.broadcast %30 : f32 to vector<2x8x8xf32>
    %32 = arith.mulf %6, %31 : vector<2x8x8xf32>
    %c5 = arith.constant 5 : index
    %33 = memref.load %arg3[%c5] : memref<8xf32, #tpu.memory_space<smem>>
    %34 = vector.broadcast %33 : f32 to vector<2x8x8xf32>
    %35 = arith.mulf %7, %34 : vector<2x8x8xf32>
    %36 = arith.addf %32, %35 : vector<2x8x8xf32>
    %c6 = arith.constant 6 : index
    %37 = memref.load %arg3[%c6] : memref<8xf32, #tpu.memory_space<smem>>
    %38 = vector.broadcast %37 : f32 to vector<2x8x8xf32>
    %39 = arith.mulf %8, %38 : vector<2x8x8xf32>
    %40 = arith.addf %36, %39 : vector<2x8x8xf32>
    %c7 = arith.constant 7 : index
    %41 = memref.load %arg3[%c7] : memref<8xf32, #tpu.memory_space<smem>>
    %42 = vector.broadcast %41 : f32 to vector<2x8x8xf32>
    %43 = arith.mulf %9, %42 : vector<2x8x8xf32>
    %44 = arith.addf %40, %43 : vector<2x8x8xf32>
    %cst_9 = arith.constant 0.000000e+00 : f32
    %45 = vector.broadcast %cst_9 : f32 to vector<2x8x8xf32>
    %46 = arith.maximumf %44, %45 : vector<2x8x8xf32>
    %c0_10 = arith.constant 0 : index
    %c1_11 = arith.constant 1 : index
    %c0_12 = arith.constant 0 : index
    %c0_13 = arith.constant 0 : index
    %47 = vector.load %arg4[%c0_10, %c1_11, %c0_12, %c0_13] : memref<2x2x8x8xf32, #tpu.memory_space<vmem>>, vector<2x1x8x8xf32>
    %48 = vector.shape_cast %47 : vector<2x1x8x8xf32> to vector<2x8x8xf32>
    %49 = vector.shape_cast %46 : vector<2x8x8xf32> to vector<2x1x8x8xf32>
    tpu.vector_store %arg4[%c0_10, %c1_11, %c0_12, %c0_13], %49 {strides = array<i32>} : memref<2x2x8x8xf32, #tpu.memory_space<vmem>>, vector<2x1x8x8xf32>,
    return
  }
  func.func @transform_0(%arg0: i32) -> (i32, i32, i32) {
    %c0_i32 = arith.constant 0 : i32
    %c0_i32_0 = arith.constant 0 : i32
    %c0_i32_1 = arith.constant 0 : i32
    return %arg0, %c0_i32, %c0_i32_0 : i32, i32, i32
  }
  func.func @transform_1(%arg0: i32) -> i32 {
    %c0_i32 = arith.constant 0 : i32
    %c0_i32_0 = arith.constant 0 : i32
    return %c0_i32 : i32
  }
  func.func @transform_2(%arg0: i32) -> i32 {
    %c0_i32 = arith.constant 0 : i32
    %c0_i32_0 = arith.constant 0 : i32
    return %c0_i32 : i32
  }
  func.func @transform_3(%arg0: i32) -> (i32, i32, i32, i32) {
    %c0_i32 = arith.constant 0 : i32
    %c0_i32_0 = arith.constant 0 : i32
    %c0_i32_1 = arith.constant 0 : i32
    %c0_i32_2 = arith.constant 0 : i32
    return %arg0, %c0_i32, %c0_i32_0, %c0_i32_1 : i32, i32, i32, i32
  }
}

</mosaic_0001>

<llo_original>
// kernel: tpu_custom_call.1
$region0: #{tpu_custom_call.1}
  #allocation0 [shape = 'u32[]', space=smem, size = 0x4, offset = 0x4, fixed_abs, tag = 'smem constant byte address 0x4 - core index']
  #allocation1 [shape = 'u32[144,128]{1,0:T(1,128)}', space=vmem, size = 0x12000, scoped, tag = 'internal scratch']
  #allocation2 [shape = 'f32[1]{0:T(128)S(6)}', space=smem, size = 0x200, scoped, tag = 'scoped memory for tpu_custom_call.1']
  %s0 = inlined_call_operand.vmem [shape: f32[4,9,9], index: 0, kind: input, shape index: {}]
  %s1 = inlined_call_operand.<no memory space> [shape: f32[1], index: 1, kind: input, shape index: {}]
  %s2 = inlined_call_operand.vmem [shape: f32[8], index: 2, kind: input, shape index: {}]
  %s3 = inlined_call_operand.hbm [shape: f32[4,2,8,8], index: 3, kind: output, shape index: {}]
  %s4 = sld [smem:[#allocation0]]
  $region49: #{tpu_custom_call.1} parent=0
    _
  %s6 = ssub.s32 1, %s4
  %s7 = scalar_select 0, %s6, %s4
  %8 = sst [smem:[#allocation2]] %s1
  $region1: #{tpu_custom_call.1} parent=0
    #allocation3 [shape = 'u8[512]{0}', space=smem, size = 0x200, scoped, tag = 'input window, operand 2, single buffered']
    #allocation4 [shape = 's32[2]{0}', space=sflag, size = 0x8, scoped, tag = 'scoped memory for tpu_custom_call.1']
    #allocation5 [shape = 's32[2]{0}', space=sflag, size = 0x8, scoped, tag = 'scoped memory for tpu_custom_call.1']
    #allocation6 [shape = 'u8[32768]{0}', space=vmem, size = 0x8000, scoped, tag = 'output window, operand 0']
    %9 = vsyncpa [#allocation5], 0
    %10 = vsyncpa [#allocation4], 0
    %s11 = scalar_lea.sflag [#allocation4], 1
    %12 = vsyncpa %s11, 0
    loop: start=0, step=1, limit=4
    $region2: #{tpu_custom_call.1} parent=1 // loop_pre_header
      _
    $region3: #{tpu_custom_call.1} parent=1 // loop_header
      %s14 = sphi 0, %s18
      %p15 = scmp.ge.s32.totalorder %s14, 4
      %s24 = sphi 0, %s26
      %s27 = sphi 0, %s24
      %s28 = sphi 0, %s27
      %s44 = sphi 0, %s28
      %s48 = sphi 0, %s48
      %s50 = sphi 0, %s48
      %s51 = sphi 0, %s50
      %s65 = sphi 0, %s51
      %s69 = sphi 0, %s69
      %s71 = sphi 0, %s69
      %s72 = sphi 0, %s71
      %s86 = sphi 0, %s72
      %s92 = sphi 0, %s94
      %s95 = sphi 0, %s92
      %s96 = sphi 0, %s95
      %s112 = sphi 0, %s96
    $region4: #{tpu_custom_call.1} parent=1 // loop_header_branch
      %17 = sbr.rel (%p15) target = $region8
    $region5: #{tpu_custom_call.1} parent=1 // loop_body
      %s19 = ssub.s32 %s14, 1
      %s20 = ssub.s32 %s14, 2
      %s21 = sadd.s32 %s14, 1
      %s22 = ssub.s32 %s14, %s21
      %p23 = scmp.eq.s32.totalorder %s22, 0
      %s25 = sadd.s32 %s24, 1
      %s26 = scalar_select %p23, %s24, %s25
      %p29 = pneg %p23
      %p30 = scmp.eq.s32.totalorder %s14, 1
      %p31 = por %p29, %p30
      %p32 = scmp.ne.s32.totalorder %s24, %s27
      %p33 = scmp.eq.s32.totalorder %s14, 0
      %p34 = por %p32, %p33
      %p35 = scmp.ne.s32.totalorder %s24, %s27
      %p36 = scmp.eq.s32.totalorder %s19, 1
      %p37 = por %p35, %p36
      %p38 = scmp.ne.s32.totalorder %s27, %s28
      %p39 = scmp.eq.s32.totalorder %s19, 0
      %p40 = por %p38, %p39
      %p41 = scmp.ne.s32.totalorder %s27, %s28
      %p42 = scmp.eq.s32.totalorder %s20, 1
      %p43 = por %p41, %p42
      %p45 = scmp.ne.s32.totalorder %s28, %s44
      %p46 = scmp.eq.s32.totalorder %s20, 0
      %p47 = por %p45, %p46
      %s49 = sadd.s32 %s48, 1
      %p52 = scmp.eq.s32.totalorder %s14, 1
      %p53 = scmp.ne.s32.totalorder %s48, %s50
      %p54 = scmp.eq.s32.totalorder %s14, 0
      %p55 = por %p53, %p54
      %p56 = scmp.ne.s32.totalorder %s48, %s50
      %p57 = scmp.eq.s32.totalorder %s19, 1
      %p58 = por %p56, %p57
      %p59 = scmp.ne.s32.totalorder %s50, %s51
      %p60 = scmp.eq.s32.totalorder %s19, 0
      %p61 = por %p59, %p60
      %p62 = scmp.ne.s32.totalorder %s50, %s51
      %p63 = scmp.eq.s32.totalorder %s20, 1
      %p64 = por %p62, %p63
      %p66 = scmp.ne.s32.totalorder %s51, %s65
      %p67 = scmp.eq.s32.totalorder %s20, 0
      %p68 = por %p66, %p67
      %s70 = sadd.s32 %s69, 1
      %p73 = scmp.eq.s32.totalorder %s14, 1
      %p74 = scmp.ne.s32.totalorder %s69, %s71
      %p75 = scmp.eq.s32.totalorder %s14, 0
      %p76 = por %p74, %p75
      %p77 = scmp.ne.s32.totalorder %s69, %s71
      %p78 = scmp.eq.s32.totalorder %s19, 1
      %p79 = por %p77, %p78
      %p80 = scmp.ne.s32.totalorder %s71, %s72
      %p81 = scmp.eq.s32.totalorder %s19, 0
      %p82 = por %p80, %p81
      %p83 = scmp.ne.s32.totalorder %s71, %s72
      %p84 = scmp.eq.s32.totalorder %s20, 1
      %p85 = por %p83, %p84
      %p87 = scmp.ne.s32.totalorder %s72, %s86
      %p88 = scmp.eq.s32.totalorder %s20, 0
      %p89 = por %p87, %p88
      %s90 = ssub.s32 %s14, %s21
      %p91 = scmp.eq.s32.totalorder %s90, 0
      %s93 = sadd.s32 %s92, 1
      %s94 = scalar_select %p91, %s92, %s93
      %p97 = pneg %p91
      %p98 = scmp.eq.s32.totalorder %s14, 1
      %p99 = por %p97, %p98
      %p100 = scmp.ne.s32.totalorder %s92, %s95
      %p101 = scmp.eq.s32.totalorder %s14, 0
      %p102 = por %p100, %p101
      %p103 = scmp.ne.s32.totalorder %s92, %s95
      %p104 = scmp.eq.s32.totalorder %s19, 1
      %p105 = por %p103, %p104
      %p106 = scmp.ne.s32.totalorder %s95, %s96
      %p107 = scmp.eq.s32.totalorder %s19, 0
      %p108 = por %p106, %p107
      %p109 = scmp.ne.s32.totalorder %s95, %s96
      %p110 = scmp.eq.s32.totalorder %s20, 1
      %p111 = por %p109, %p110
      %p113 = scmp.ne.s32.totalorder %s96, %s112
      %p114 = scmp.eq.s32.totalorder %s20, 0
      %p115 = por %p113, %p114
      %p116 = scmp.le.s32.totalorder 1, %s14
      %p117 = scmp.lt.s32.totalorder %s14, 3
      %p118 = pnand %p116, %p117
      %p119 = pneg %p118
      // Predicated region
      $region9: #{tpu_custom_call.1} parent=5 // pred_check
        _
      $region10: #{tpu_custom_call.1} parent=5 // pred_check_branch
        %121 = sbr.rel (%p118) target = $region12
      $region11: #{tpu_custom_call.1} parent=5 // pred_region
        %s122 = ssub.s32 %s14, 1
        // Predicated region
        $region13: #{tpu_custom_call.1} parent=11 // pred_check
          %p123 = pneg %p61
        $region14: #{tpu_custom_call.1} parent=11 // pred_check_branch
          %125 = sbr.rel (%p123) target = $region16
        $region15: #{tpu_custom_call.1} parent=11 // pred_region
          _
        $region16: #{tpu_custom_call.1} parent=11 // pred_fallthru
          _
        // Predicated region
        $region17: #{tpu_custom_call.1} parent=11 // pred_check
          %p126 = pneg %p82
        $region18: #{tpu_custom_call.1} parent=11 // pred_check_branch
          %128 = sbr.rel (%p126) target = $region20
        $region19: #{tpu_custom_call.1} parent=11 // pred_region
          %s130 = ssub.s32 16, 16
          %131 = vsyncadd [#allocation5], %s130
          %s133 = sshll.u32 %s2, 4
          %s134 = int_to_ptr.vmem [resolvable:$true] %s133
          %136 = dma.vmem_to_smem %s134, 16, [#allocation3], [#allocation5]
        $region20: #{tpu_custom_call.1} parent=11 // pred_fallthru
          _
      $region12: #{tpu_custom_call.1} parent=5 // pred_fallthru
        _
      %p137 = scmp.lt.s32.totalorder %s14, 2
      // Predicated region
      $region21: #{tpu_custom_call.1} parent=5 // pred_check
        %p138 = pneg %p137
      $region22: #{tpu_custom_call.1} parent=5 // pred_check_branch
        %140 = sbr.rel (%p138) target = $region24
      $region23: #{tpu_custom_call.1} parent=5 // pred_region
        // Predicated region
        $region25: #{tpu_custom_call.1} parent=23 // pred_check
          %p141 = pneg %p34
        $region26: #{tpu_custom_call.1} parent=23 // pred_check_branch
          %143 = sbr.rel (%p141) target = $region28
        $region27: #{tpu_custom_call.1} parent=23 // pred_region
          %s144 = smul.u32 2, %s14
          %p145 = scmp.lt.s32.totalorder %s144, 3
          %s146 = scalar_select %p145, %s144, 3
          %s147 = smul.addr %s146, 2
          %s148 = smul.addr %s147, 8
          %s149 = scalar_lea.vmem %s0, %s148
          %s150 = smul.u32 2, %s14
        $region28: #{tpu_custom_call.1} parent=23 // pred_fallthru
          _
      $region24: #{tpu_custom_call.1} parent=5 // pred_fallthru
        _
      %p151 = scmp.le.s32.totalorder 1, %s14
      %p152 = scmp.lt.s32.totalorder %s14, 3
      %p153 = pnand %p151, %p152
      %p154 = pneg %p153
      // Predicated region
      $region29: #{tpu_custom_call.1} parent=5 // pred_check
        _
      $region30: #{tpu_custom_call.1} parent=5 // pred_check_branch
        %156 = sbr.rel (%p153) target = $region32
      $region31: #{tpu_custom_call.1} parent=5 // pred_region
        %s157 = ssub.s32 %s14, 1
        // Predicated region
        $region33: #{tpu_custom_call.1} parent=31 // pred_check
          %p158 = pneg %p82
        $region34: #{tpu_custom_call.1} parent=31 // pred_check_branch
          %160 = sbr.rel (%p158) target = $region36
        $region35: #{tpu_custom_call.1} parent=31 // pred_region
          %161 = dma.done [#allocation5], 16
        $region36: #{tpu_custom_call.1} parent=31 // pred_fallthru
          _
        %162 = sfence
        %s163 = smul.u32 2, %s19
        %p164 = scmp.lt.s32.totalorder %s163, 3
        %s165 = scalar_select %p164, %s163, 3
        %s166 = smul.addr %s165, 2
        %s167 = smul.addr %s166, 8
        %s168 = scalar_lea.vmem %s0, %s167
        %p169 = pneg %p40
        %p170 = pneg %p37
        %p171 = pneg %p61
        %p172 = pneg %p58
        %p173 = pneg %p82
        %p174 = pneg %p79
        %p175 = pneg %p108
        %p176 = pneg %p105
        %s177 = sand.u32 %s95, 1
        %s178 = scalar_lea.sflag [#allocation4], %s177
        %s179 = sand.u32 %s95, 1
        %s180 = smul.addr %s179, 32
        %s181 = scalar_lea.vmem [#allocation6], %s180
        %s182 = smul.u32 2, %s19
        %p183 = scmp.lt.s32.totalorder %s182, 3
        %s184 = scalar_select %p183, %s182, 3
        %s185 = smul.addr %s184, 2
        %s186 = smul.addr %s185, 8
        %s187 = scalar_lea.vmem %s0, %s186
        %s188 = smul.u32 2, %s19
        %s189 = smul.u32 2, %s19
        %v190 = vld [vmem:[%s187] sm:$0xff]
        %v191 = vld [vmem:[%s187 + $0x8] sm:$0x1]
        %v192 = vld [vmem:[%s187 + $0x10] sm:$0xff]
        %v193 = vld [vmem:[%s187 + $0x18] sm:$0x1]
        %s194 = sld [smem:[#allocation2]]
        %v195 = vstv %s194
        %v196 = vmul.f32 %v190, %v195
        %v197 = vmul.f32 %v191, %v195
        %v198 = vmul.f32 %v192, %v195
        %v199 = vmul.f32 %v193, %v195
        %v200 = vmax.f32 %v196, 0.0
        %v201 = vmax.f32 %v197, 0.0
        %v202 = vmax.f32 %v198, 0.0
        %v203 = vmax.f32 %v199, 0.0
        %s204 = sld [smem:[#allocation3]]
        %v205 = vstv %s204
        %v206 = vmul.f32 %v200, %v205
        %v207 = vmul.f32 %v202, %v205
        %s208 = sld [smem:[#allocation3 + $0x1]]
        %v209 = vstv %s208
        %v210 = vmul.f32 %v200, %v209
        %v211 = vmul.f32 %v202, %v209
        %214 = vrot.lane.b32.xlu0 %v210, 127
        %v215 = vpop.permute.xlu0 %214
        %216 = vrot.lane.b32.xlu0 %v211, 127
        %v217 = vpop.permute.xlu0 %216
        %v220 = vadd.f32 %v206, %v215
        %v221 = vadd.f32 %v207, %v217
        %s222 = sld [smem:[#allocation3 + $0x2]]
        %v223 = vstv %s222
        %v224 = vmul.f32 %v200, %v223
        %v225 = vmul.f32 %v201, %v223
        %v226 = vmul.f32 %v202, %v223
        %v227 = vmul.f32 %v203, %v223
        %vm232 = vcmask 1046528
        %v233 = vrot.slane %v224, 1
        %v234 = vrot.slane %v225, 1
        %v235 = vsel %vm232, %v233, %v234
        %v236 = vrot.slane %v226, 1
        %v237 = vrot.slane %v227, 1
        %v238 = vsel %vm232, %v236, %v237
        %v241 = vadd.f32 %v220, %v235
        %v242 = vadd.f32 %v221, %v238
        %s243 = sld [smem:[#allocation3 + $0x3]]
        %v244 = vstv %s243
        %v245 = vmul.f32 %v200, %v244
        %v246 = vmul.f32 %v201, %v244
        %v247 = vmul.f32 %v202, %v244
        %v248 = vmul.f32 %v203, %v244
        %v253 = vrot.slane %v245, 1
        %v254 = vrot.slane %v246, 1
        %v255 = vsel %vm232, %v253, %v254
        %v256 = vrot.slane %v247, 1
        %v257 = vrot.slane %v248, 1
        %v258 = vsel %vm232, %v256, %v257
        %259 = vrot.lane.b32.xlu0 %v255, 127
        %v260 = vpop.permute.xlu0 %259
        %261 = vrot.lane.b32.xlu0 %v258, 127
        %v262 = vpop.permute.xlu0 %261
        %v265 = vadd.f32 %v241, %v260
        %v266 = vadd.f32 %v242, %v262
        %v267 = vmax.f32 %v265, 0.0
        %v268 = vmax.f32 %v266, 0.0
        %vm269 = vcmask 64512
        %270 = vst.msk [vmem:[%s181] sm:$0xff] %vm269, %v267
        %271 = vst.msk [vmem:[%s181 + $0x10] sm:$0xff] %vm269, %v268
        %s272 = sld [smem:[#allocation3 + $0x4]]
        %v273 = vstv %s272
        %v274 = vmul.f32 %v200, %v273
        %v275 = vmul.f32 %v202, %v273
        %s276 = sld [smem:[#allocation3 + $0x5]]
        %v277 = vstv %s276
        %v278 = vmul.f32 %v200, %v277
        %v279 = vmul.f32 %v202, %v277
        %282 = vrot.lane.b32.xlu0 %v278, 127
        %v283 = vpop.permute.xlu0 %282
        %284 = vrot.lane.b32.xlu0 %v279, 127
        %v285 = vpop.permute.xlu0 %284
        %v288 = vadd.f32 %v274, %v283
        %v289 = vadd.f32 %v275, %v285
        %s290 = sld [smem:[#allocation3 + $0x6]]
        %v291 = vstv %s290
        %v292 = vmul.f32 %v200, %v291
        %v293 = vmul.f32 %v201, %v291
        %v294 = vmul.f32 %v202, %v291
        %v295 = vmul.f32 %v203, %v291
        %v300 = vrot.slane %v292, 1
        %v301 = vrot.slane %v293, 1
        %v302 = vsel %vm232, %v300, %v301
        %v303 = vrot.slane %v294, 1
        %v304 = vrot.slane %v295, 1
        %v305 = vsel %vm232, %v303, %v304
        %v308 = vadd.f32 %v288, %v302
        %v309 = vadd.f32 %v289, %v305
        %s310 = sld [smem:[#allocation3 + $0x7]]
        %v311 = vstv %s310
        %v312 = vmul.f32 %v200, %v311
        %v313 = vmul.f32 %v201, %v311
        %v314 = vmul.f32 %v202, %v311
        %v315 = vmul.f32 %v203, %v311
        %v320 = vrot.slane %v312, 1
        %v321 = vrot.slane %v313, 1
        %v322 = vsel %vm232, %v320, %v321
        %v323 = vrot.slane %v314, 1
        %v324 = vrot.slane %v315, 1
        %v325 = vsel %vm232, %v323, %v324
        %326 = vrot.lane.b32.xlu0 %v322, 127
        %v327 = vpop.permute.xlu0 %326
        %328 = vrot.lane.b32.xlu0 %v325, 127
        %v329 = vpop.permute.xlu0 %328
        %v332 = vadd.f32 %v308, %v327
        %v333 = vadd.f32 %v309, %v329
        %v334 = vmax.f32 %v332, 0.0
        %v335 = vmax.f32 %v333, 0.0
        %s336 = scalar_lea.vmem %s181, 8 [#allocation6]
        %337 = vst.msk [vmem:[%s336] sm:$0xff] %vm269, %v334
        %338 = vst.msk [vmem:[%s336 + $0x10] sm:$0xff] %vm269, %v335
        %s339 = sand.u32 %s95, 1
        %s340 = scalar_lea.sflag [#allocation4], %s339
        %s341 = sand.u32 %s95, 1
        %s342 = smul.addr %s341, 32
        %s343 = scalar_lea.vmem [#allocation6], %s342
        // Predicated region
        $region37: #{tpu_custom_call.1} parent=31 // pred_check
          %p344 = pneg %p105
        $region38: #{tpu_custom_call.1} parent=31 // pred_check_branch
          %346 = sbr.rel (%p344) target = $region40
        $region39: #{tpu_custom_call.1} parent=31 // pred_region
          %s347 = smul.u32 2, %s19
          %s349 = ssub.s32 512, 512
          %350 = vsyncadd %s340, %s349
          %s351 = smul.addr %s347, 2
          %s352 = smul.addr %s351, 128
          %s353 = scalar_lea.hbm %s3, %s352
          %s354 = sshll.u32 %s343, 4
          %s355 = int_to_ptr.vmem [resolvable:$true] %s354
          %360 = dma.vmem_to_hbm [thread:$0]  %s355, 512, %s353, %s340, 128, 128, 8
        $region40: #{tpu_custom_call.1} parent=31 // pred_fallthru
          _
      $region32: #{tpu_custom_call.1} parent=5 // pred_fallthru
        _
      %p361 = scmp.le.s32.totalorder 2, %s14
      // Predicated region
      $region41: #{tpu_custom_call.1} parent=5 // pred_check
        %p362 = pneg %p361
      $region42: #{tpu_custom_call.1} parent=5 // pred_check_branch
        %364 = sbr.rel (%p362) target = $region44
      $region43: #{tpu_custom_call.1} parent=5 // pred_region
        %s365 = ssub.s32 %s14, 2
        // Predicated region
        $region45: #{tpu_custom_call.1} parent=43 // pred_check
          %p366 = pneg %p111
        $region46: #{tpu_custom_call.1} parent=43 // pred_check_branch
          %368 = sbr.rel (%p366) target = $region48
        $region47: #{tpu_custom_call.1} parent=43 // pred_region
          %s369 = sand.u32 %s96, 1
          %s370 = scalar_lea.sflag [#allocation4], %s369
          %s371 = sand.u32 %s96, 1
          %s372 = smul.addr %s371, 32
          %s373 = scalar_lea.vmem [#allocation6], %s372
          %374 = dma.done %s370, 512
        $region48: #{tpu_custom_call.1} parent=43 // pred_fallthru
          _
      $region44: #{tpu_custom_call.1} parent=5 // pred_fallthru
        _
    $region6: #{tpu_custom_call.1} parent=1 // loop_footer
      %s18 = sadd.s32 1, %s14
    $region7: #{tpu_custom_call.1} parent=1 // loop_footer_branch
      %13 = sbr.rel target = $region3
    $region8: #{tpu_custom_call.1} parent=1 // loop_exit
      _
    %375 = vsyncpa [#allocation4], 1
    %s376 = scalar_lea.sflag [#allocation4], 1
    %377 = vsyncpa %s376, 1
    %378 = vsyncpa [#allocation5], 1
    %s379 = scalar_lea.sflag [#allocation5], 1
    %380 = vsyncpa %s379, 1

</llo_original>
